<compile_context>
chip_gen: v7x
topology: tpu7x:2x2x1
jax: 0.10.0
libtpu: 0.0.40
codegen_flags: <defaults>
</compile_context>

<pallas_src>
import jax
import jax.numpy as jnp
from jax.experimental import pallas as pl
from jax.experimental.pallas import tpu as pltpu

SIZE_LIST = [16, 64, 32, 8]   # input, hidden1, hidden2, output
LANE = 128                    # TPU lane width: hidden dims padded to this


def _round_up(n, m):
    return ((n + m - 1) // m) * m


# ----------------------------------------------------------------------------
# Kernel: full MLP on one batch tile; intermediates never touch HBM.
# ----------------------------------------------------------------------------
def _mlp_kernel(x_ref, w1_ref, b1_ref, w2_ref, b2_ref, w3_ref, b3_ref, o_ref):
    # In-kernel f32 -> bf16 cast of the input tile (cheap VPU work).
    x = x_ref[...].astype(w1_ref.dtype)

    # Layer 1: Linear (f32 accumulation on the MXU) + bias + ReLU in f32.
    h = jnp.dot(x, w1_ref[...], preferred_element_type=jnp.float32)
    h = jnp.maximum(h + b1_ref[...], 0.0)

    # Layer 2.
    h = jnp.dot(h.astype(w2_ref.dtype), w2_ref[...],
                preferred_element_type=jnp.float32)
    h = jnp.maximum(h + b2_ref[...], 0.0)

    # Layer 3: final Linear, no activation.  Store only the real 8 columns.
    h = jnp.dot(h.astype(w3_ref.dtype), w3_ref[...],
                preferred_element_type=jnp.float32)
    h = h + b3_ref[...]
    o_ref[...] = h[:, : o_ref.shape[-1]].astype(o_ref.dtype)


# ----------------------------------------------------------------------------
# Wrapper: layout plumbing + pallas_call.
# ----------------------------------------------------------------------------
def _choose_tb(batch, block_batch):
    # Number of batch tiles: respect block_batch; use >=2 tiles when the batch
    # is large so v7x's two TensorCores both get work.
    n_tiles = max(1, pl.cdiv(batch, block_batch))
    if batch >= 512:
        n_tiles = max(n_tiles, 2)
    # Round to 16 so bf16 (16, 128) sublane tiling is always legal and the
    # last tile is nearly full (minimal padding waste).
    return _round_up(pl.cdiv(batch, n_tiles), 16)


def dnn_forward(x, params, *, block_batch=4096, compute_dtype=jnp.bfloat16,
                out_dtype=jnp.float32):
    """Forward pass of default-mode DNNBase with size_list = SIZE_LIST.

    x:      (batch, 16) float array (kept in its original dtype in HBM)
    params: [(W1, b1), (W2, b2), (W3, b3)] with W in torch layout (out, in).
    """
    (w1, b1), (w2, b2), (w3, b3) = params
    batch, f_in = x.shape
    assert f_in == SIZE_LIST[0]
    f_out = SIZE_LIST[-1]

    def pad_w(w, rows):  # torch (out, in) -> (rows, 128) in (in, out) layout
        wt = jnp.transpose(w).astype(compute_dtype)
        return jnp.zeros((rows, LANE), compute_dtype).at[
            : wt.shape[0], : wt.shape[1]].set(wt)

    def pad_b(b):  # bias kept in f32: added to the f32 accumulator
        return jnp.zeros((1, LANE), jnp.float32).at[0, : b.shape[0]].set(
            b.astype(jnp.float32))

    w1p = pad_w(w1, SIZE_LIST[0])   # (16, 128)   no padded input rows
    w2p = pad_w(w2, LANE)           # (128, 128)
    w3p = pad_w(w3, LANE)           # (128, 128)
    b1p, b2p, b3p = pad_b(b1), pad_b(b2), pad_b(b3)

    # Batch tiling: tile only the batch axis; pad rows only if needed.
    tb = _choose_tb(batch, block_batch)
    b_pad = _round_up(batch, tb)
    if b_pad != batch:
        x_in = jnp.zeros((b_pad, f_in), x.dtype).at[:batch].set(x)
    else:
        x_in = x

    grid = (b_pad // tb,)

    def resident(shape):
        # Full-array block with a constant index_map => one DMA, stays in VMEM.
        return pl.BlockSpec(shape, lambda i: (0, 0))

    # Advisory cost: real flops / real (narrow) HBM traffic.
    flops = 2 * b_pad * sum(SIZE_LIST[i] * SIZE_LIST[i + 1]
                            for i in range(len(SIZE_LIST) - 1))
    weight_bytes = sum(int(a.size) * a.dtype.itemsize
                       for a in (w1p, w2p, w3p, b1p, b2p, b3p))
    bytes_accessed = (b_pad * f_in * x_in.dtype.itemsize
                      + b_pad * f_out * jnp.dtype(out_dtype).itemsize
                      + weight_bytes)

    out = pl.pallas_call(
        _mlp_kernel,
        out_shape=jax.ShapeDtypeStruct((b_pad, f_out), out_dtype),
        grid_spec=pltpu.PrefetchScalarGridSpec(
            num_scalar_prefetch=0,
            grid=grid,
            in_specs=[
                pl.BlockSpec((tb, f_in), lambda i: (i, 0)),   # x (streamed, narrow)
                resident((SIZE_LIST[0], LANE)),               # W1 (resident)
                resident((1, LANE)),                          # b1
                resident((LANE, LANE)),                       # W2
                resident((1, LANE)),                          # b2
                resident((LANE, LANE)),                       # W3
                resident((1, LANE)),                          # b3
            ],
            out_specs=pl.BlockSpec((tb, f_out), lambda i: (i, 0)),
        ),
        compiler_params=pltpu.CompilerParams(
            # Batch tiles are independent -> shard across v7x's two TCs.
            dimension_semantics=("parallel",),
        ),
        cost_estimate=pl.CostEstimate(flops=flops, transcendentals=0,
                                      bytes_accessed=bytes_accessed),
    )(x_in, w1p, b1p, w2p, b2p, w3p, b3p)

    # Output is already the real 8 features; drop padded batch rows if any.
    return out[:batch] if b_pad != batch else out


# ----------------------------------------------------------------------------
# Pure-JAX reference (same bf16 quantization of inputs/weights, f32 math).
# ----------------------------------------------------------------------------
def dnn_forward_ref(x, params, compute_dtype=jnp.bfloat16):
    (w1, b1), (w2, b2), (w3, b3) = params

    def lin(h, w, b):
        wq = w.astype(compute_dtype).astype(jnp.float32)
        return h @ jnp.transpose(wq) + b.astype(jnp.float32)

    h = x.astype(compute_dtype).astype(jnp.float32)
    h = jnp.maximum(lin(h, w1, b1), 0.0)
    h = h.astype(compute_dtype).astype(jnp.float32)
    h = jnp.maximum(lin(h, w2, b2), 0.0)
    h = h.astype(compute_dtype).astype(jnp.float32)
    return lin(h, w3, b3)


def init_params(key, size_list):
    """nn.Linear default init: U(-1/sqrt(fan_in), 1/sqrt(fan_in)) for W and b."""
    params = []
    for i in range(len(size_list) - 1):
        fan_in, fan_out = size_list[i], size_list[i + 1]
        key, kw, kb = jax.random.split(key, 3)
        bound = 1.0 / (fan_in ** 0.5)
        w = jax.random.uniform(kw, (fan_out, fan_in), jnp.float32, -bound, bound)
        b = jax.random.uniform(kb, (fan_out,), jnp.float32, -bound, bound)
        params.append((w, b))
    return params


if __name__ == "__main__":
    key = jax.random.PRNGKey(0)
    k_x, k_p = jax.random.split(key)

    batch, f_in = 64, SIZE_LIST[0]
    x = jax.random.normal(k_x, (batch, f_in), jnp.float32)
    params = init_params(k_p, SIZE_LIST)

    y = dnn_forward(x, params)
    y = jax.block_until_ready(y)

    y_ref = dnn_forward_ref(x, params)
    assert y.shape == (batch, SIZE_LIST[-1]), y.shape
    max_err = float(jnp.max(jnp.abs(y - y_ref)))
    assert max_err < 5e-3, f"max abs error {max_err}"

    print("KERNEL_OK")
</pallas_src>

<mosaic_0001>
module attributes {stable_mosaic.version = 11 : i64} {
  func.func @_mlp_kernel(%arg0: i32, %arg1: memref<64x16xf32, #tpu.memory_space<vmem>>, %arg2: memref<16x128xbf16, #tpu.memory_space<vmem>>, %arg3: memref<1x128xf32, #tpu.memory_space<vmem>>, %arg4: memref<128x128xbf16, #tpu.memory_space<vmem>>, %arg5: memref<1x128xf32, #tpu.memory_space<vmem>>, %arg6: memref<128x128xbf16, #tpu.memory_space<vmem>>, %arg7: memref<1x128xf32, #tpu.memory_space<vmem>>, %arg8: memref<64x8xf32, #tpu.memory_space<vmem>>) attributes {dimension_semantics = [#tpu.dimension_semantics<parallel>], iteration_bounds = array<i64: 1>, scalar_prefetch = 0 : i64, scratch_operands = 0 : i64, tpu.core_type = #tpu.core_type<tc>, window_params = [{transform_indices = @transform_0, window_bounds = array<i64: 64, 16>}, {pipeline_mode = #tpu.pipeline_mode<synchronous>, transform_indices = @transform_1, window_bounds = array<i64: 16, 128>}, {pipeline_mode = #tpu.pipeline_mode<synchronous>, transform_indices = @transform_2, window_bounds = array<i64: 1, 128>}, {pipeline_mode = #tpu.pipeline_mode<synchronous>, transform_indices = @transform_3, window_bounds = array<i64: 128, 128>}, {pipeline_mode = #tpu.pipeline_mode<synchronous>, transform_indices = @transform_4, window_bounds = array<i64: 1, 128>}, {pipeline_mode = #tpu.pipeline_mode<synchronous>, transform_indices = @transform_5, window_bounds = array<i64: 128, 128>}, {pipeline_mode = #tpu.pipeline_mode<synchronous>, transform_indices = @transform_6, window_bounds = array<i64: 1, 128>}, {transform_indices = @transform_7, window_bounds = array<i64: 64, 8>}]} {
    %c0 = arith.constant 0 : index
    %c0_0 = arith.constant 0 : index
    %0 = vector.load %arg1[%c0, %c0_0] : memref<64x16xf32, #tpu.memory_space<vmem>>, vector<64x16xf32>
    %1 = arith.truncf %0 : vector<64x16xf32> to vector<64x16xbf16>
    %c0_1 = arith.constant 0 : index
    %c0_2 = arith.constant 0 : index
    %2 = vector.load %arg2[%c0_1, %c0_2] : memref<16x128xbf16, #tpu.memory_space<vmem>>, vector<16x128xbf16>
    %cst = arith.constant dense<0.000000e+00> : vector<64x128xf32>
    %3 = tpu.matmul %1, %2, %cst {dimension_numbers = #tpu.dot_dimension_numbers<[1], [0], [0], [1], [0, 0, 1, 1], [], []>} : vector<64x16xbf16>, vector<16x128xbf16>, vector<64x128xf32> -> vector<64x128xf32>
    %c0_3 = arith.constant 0 : index
    %c0_4 = arith.constant 0 : index
    %4 = vector.load %arg3[%c0_3, %c0_4] : memref<1x128xf32, #tpu.memory_space<vmem>>, vector<1x128xf32>
    %5 = vector.broadcast %4 : vector<1x128xf32> to vector<64x128xf32>
    %6 = arith.addf %3, %5 : vector<64x128xf32>
    %cst_5 = arith.constant 0.000000e+00 : f32
    %7 = vector.broadcast %cst_5 : f32 to vector<64x128xf32>
    %8 = arith.maximumf %6, %7 : vector<64x128xf32>
    %9 = arith.truncf %8 : vector<64x128xf32> to vector<64x128xbf16>
    %c0_6 = arith.constant 0 : index
    %c0_7 = arith.constant 0 : index
    %10 = vector.load %arg4[%c0_6, %c0_7] : memref<128x128xbf16, #tpu.memory_space<vmem>>, vector<128x128xbf16>
    %cst_8 = arith.constant dense<0.000000e+00> : vector<64x128xf32>
    %11 = tpu.matmul %9, %10, %cst_8 {dimension_numbers = #tpu.dot_dimension_numbers<[1], [0], [0], [1], [0, 0, 1, 1], [], []>} : vector<64x128xbf16>, vector<128x128xbf16>, vector<64x128xf32> -> vector<64x128xf32>
    %c0_9 = arith.constant 0 : index
    %c0_10 = arith.constant 0 : index
    %12 = vector.load %arg5[%c0_9, %c0_10] : memref<1x128xf32, #tpu.memory_space<vmem>>, vector<1x128xf32>
    %13 = vector.broadcast %12 : vector<1x128xf32> to vector<64x128xf32>
    %14 = arith.addf %11, %13 : vector<64x128xf32>
    %cst_11 = arith.constant 0.000000e+00 : f32
    %15 = vector.broadcast %cst_11 : f32 to vector<64x128xf32>
    %16 = arith.maximumf %14, %15 : vector<64x128xf32>
    %17 = arith.truncf %16 : vector<64x128xf32> to vector<64x128xbf16>
    %c0_12 = arith.constant 0 : index
    %c0_13 = arith.constant 0 : index
    %18 = vector.load %arg6[%c0_12, %c0_13] : memref<128x128xbf16, #tpu.memory_space<vmem>>, vector<128x128xbf16>
    %cst_14 = arith.constant dense<0.000000e+00> : vector<64x128xf32>
    %19 = tpu.matmul %17, %18, %cst_14 {dimension_numbers = #tpu.dot_dimension_numbers<[1], [0], [0], [1], [0, 0, 1, 1], [], []>} : vector<64x128xbf16>, vector<128x128xbf16>, vector<64x128xf32> -> vector<64x128xf32>
    %c0_15 = arith.constant 0 : index
    %c0_16 = arith.constant 0 : index
    %20 = vector.load %arg7[%c0_15, %c0_16] : memref<1x128xf32, #tpu.memory_space<vmem>>, vector<1x128xf32>
    %21 = vector.broadcast %20 : vector<1x128xf32> to vector<64x128xf32>
    %22 = arith.addf %19, %21 : vector<64x128xf32>
    %23 = vector.extract_strided_slice %22 {offsets = [0, 0], sizes = [64, 8], strides = [1, 1]} : vector<64x128xf32> to vector<64x8xf32>
    %c0_17 = arith.constant 0 : index
    %c0_18 = arith.constant 0 : index
    %24 = vector.load %arg8[%c0_17, %c0_18] : memref<64x8xf32, #tpu.memory_space<vmem>>, vector<64x8xf32>
    tpu.vector_store %arg8[%c0_17, %c0_18], %23 {strides = array<i32>} : memref<64x8xf32, #tpu.memory_space<vmem>>, vector<64x8xf32>,
    return
  }
  func.func @transform_0(%arg0: i32) -> (i32, i32) {
    %c0_i32 = arith.constant 0 : i32
    %c0_i32_0 = arith.constant 0 : i32
    return %arg0, %c0_i32 : i32, i32
  }
  func.func @transform_1(%arg0: i32) -> (i32, i32) {
    %c0_i32 = arith.constant 0 : i32
    %c0_i32_0 = arith.constant 0 : i32
    %c0_i32_1 = arith.constant 0 : i32
    return %c0_i32, %c0_i32_0 : i32, i32
  }
  func.func @transform_2(%arg0: i32) -> (i32, i32) {
    %c0_i32 = arith.constant 0 : i32
    %c0_i32_0 = arith.constant 0 : i32
    %c0_i32_1 = arith.constant 0 : i32
    return %c0_i32, %c0_i32_0 : i32, i32
  }
  func.func @transform_3(%arg0: i32) -> (i32, i32) {
    %c0_i32 = arith.constant 0 : i32
    %c0_i32_0 = arith.constant 0 : i32
    %c0_i32_1 = arith.constant 0 : i32
    return %c0_i32, %c0_i32_0 : i32, i32
  }
  func.func @transform_4(%arg0: i32) -> (i32, i32) {
    %c0_i32 = arith.constant 0 : i32
    %c0_i32_0 = arith.constant 0 : i32
    %c0_i32_1 = arith.constant 0 : i32
    return %c0_i32, %c0_i32_0 : i32, i32
  }
  func.func @transform_5(%arg0: i32) -> (i32, i32) {
    %c0_i32 = arith.constant 0 : i32
    %c0_i32_0 = arith.constant 0 : i32
    %c0_i32_1 = arith.constant 0 : i32
    return %c0_i32, %c0_i32_0 : i32, i32
  }
  func.func @transform_6(%arg0: i32) -> (i32, i32) {
    %c0_i32 = arith.constant 0 : i32
    %c0_i32_0 = arith.constant 0 : i32
    %c0_i32_1 = arith.constant 0 : i32
    return %c0_i32, %c0_i32_0 : i32, i32
  }
  func.func @transform_7(%arg0: i32) -> (i32, i32) {
    %c0_i32 = arith.constant 0 : i32
    %c0_i32_0 = arith.constant 0 : i32
    return %arg0, %c0_i32 : i32, i32
  }
}

</mosaic_0001>

<llo_original>
// kernel: tpu_custom_call.1
$region0: #{tpu_custom_call.1}
  #allocation0 [shape = 'u32[]', space=smem, size = 0x4, offset = 0x4, fixed_abs, tag = 'smem constant byte address 0x4 - core index']
  #allocation1 [shape = 'u32[144,128]{1,0:T(1,128)}', space=vmem, size = 0x12000, scoped, tag = 'internal scratch']
  %s0 = inlined_call_operand.vmem [shape: f32[64,16], index: 0, kind: input, shape index: {}]
  %s1 = inlined_call_operand.vmem [shape: bf16[16,128], index: 1, kind: input, shape index: {}]
  %s2 = inlined_call_operand.vmem [shape: f32[1,128], index: 2, kind: input, shape index: {}]
  %s3 = inlined_call_operand.vmem [shape: bf16[128,128], index: 3, kind: input, shape index: {}]
  %s4 = inlined_call_operand.vmem [shape: f32[1,128], index: 4, kind: input, shape index: {}]
  %s5 = inlined_call_operand.hbm [shape: bf16[128,128], index: 5, kind: input, shape index: {}]
  %s6 = inlined_call_operand.vmem [shape: f32[1,128], index: 6, kind: input, shape index: {}]
  %s7 = inlined_call_operand.vmem [shape: f32[64,8], index: 7, kind: output, shape index: {}]
  %s8 = sld [smem:[#allocation0]]
  $region42: #{tpu_custom_call.1} parent=0
    _
  %s10 = ssub.s32 1, %s8
  %s11 = scalar_select 0, %s10, %s8
  $region1: #{tpu_custom_call.1} parent=0
    #allocation2 [shape = 'u8[32768]{0}', space=vmem, size = 0x8000, scoped, tag = 'input window, operand 5, single buffered']
    #allocation3 [shape = 's32[1]{0}', space=sflag, size = 0x4, scoped, tag = 'scoped memory for tpu_custom_call.1']
    %12 = vsyncpa [#allocation3], 0
    // Predicated region
    $region2: #{tpu_custom_call.1} parent=1 // pred_check
      _
    $region3: #{tpu_custom_call.1} parent=1 // pred_check_branch
      %14 = sbr.rel (0) target = $region5
    $region4: #{tpu_custom_call.1} parent=1 // pred_region
      _
    $region5: #{tpu_custom_call.1} parent=1 // pred_fallthru
      _
    // Predicated region
    $region6: #{tpu_custom_call.1} parent=1 // pred_check
      _
    $region7: #{tpu_custom_call.1} parent=1 // pred_check_branch
      %16 = sbr.rel (0) target = $region9
    $region8: #{tpu_custom_call.1} parent=1 // pred_region
      _
    $region9: #{tpu_custom_call.1} parent=1 // pred_fallthru
      _
    // Predicated region
    $region10: #{tpu_custom_call.1} parent=1 // pred_check
      _
    $region11: #{tpu_custom_call.1} parent=1 // pred_check_branch
      %18 = sbr.rel (0) target = $region13
    $region12: #{tpu_custom_call.1} parent=1 // pred_region
      _
    $region13: #{tpu_custom_call.1} parent=1 // pred_fallthru
      _
    // Predicated region
    $region14: #{tpu_custom_call.1} parent=1 // pred_check
      _
    $region15: #{tpu_custom_call.1} parent=1 // pred_check_branch
      %20 = sbr.rel (0) target = $region17
    $region16: #{tpu_custom_call.1} parent=1 // pred_region
      _
    $region17: #{tpu_custom_call.1} parent=1 // pred_fallthru
      _
    // Predicated region
    $region18: #{tpu_custom_call.1} parent=1 // pred_check
      _
    $region19: #{tpu_custom_call.1} parent=1 // pred_check_branch
      %22 = sbr.rel (0) target = $region21
    $region20: #{tpu_custom_call.1} parent=1 // pred_region
      _
    $region21: #{tpu_custom_call.1} parent=1 // pred_fallthru
      _
    // Predicated region
    $region22: #{tpu_custom_call.1} parent=1 // pred_check
      _
    $region23: #{tpu_custom_call.1} parent=1 // pred_check_branch
      %24 = sbr.rel (0) target = $region25
    $region24: #{tpu_custom_call.1} parent=1 // pred_region
      %s26 = ssub.s32 1024, 1024
      %27 = vsyncadd [#allocation3], %s26
      %s28 = sshll.u32 [#allocation2], 4
      %s29 = int_to_ptr.vmem [resolvable:$true] %s28
      %34 = dma.hbm_to_vmem [thread:$0]  %s5, 1024, %s29, [#allocation3], 64, 64, 4
    $region25: #{tpu_custom_call.1} parent=1 // pred_fallthru
      _
    // Predicated region
    $region26: #{tpu_custom_call.1} parent=1 // pred_check
      _
    $region27: #{tpu_custom_call.1} parent=1 // pred_check_branch
      %36 = sbr.rel (0) target = $region29
    $region28: #{tpu_custom_call.1} parent=1 // pred_region
      _
    $region29: #{tpu_custom_call.1} parent=1 // pred_fallthru
      _
    // Predicated region
    $region30: #{tpu_custom_call.1} parent=1 // pred_check
      _
    $region31: #{tpu_custom_call.1} parent=1 // pred_check_branch
      %38 = sbr.rel (0) target = $region33
    $region32: #{tpu_custom_call.1} parent=1 // pred_region
      %39 = dma.done [#allocation3], 1024
    $region33: #{tpu_custom_call.1} parent=1 // pred_fallthru
      _
    %v41 = vld [vmem:[%s0] sm:$0xff]
    %v42 = vld [vmem:[%s0 + $0x8] sm:$0xff]
    %v43 = vld [vmem:[%s0 + $0x10] sm:$0xff]
    %v44 = vld [vmem:[%s0 + $0x18] sm:$0xff]
    %v45 = vld [vmem:[%s0 + $0x20] sm:$0xff]
    %v46 = vld [vmem:[%s0 + $0x28] sm:$0xff]
    %v47 = vld [vmem:[%s0 + $0x30] sm:$0xff]
    %v48 = vld [vmem:[%s0 + $0x38] sm:$0xff]
    %v49 = vpack.c.bf16 %v42, %v41
    %v50 = vpack.c.bf16 %v44, %v43
    %v51 = vpack.c.bf16 %v46, %v45
    %v52 = vpack.c.bf16 %v48, %v47
    %v53 = vld [vmem:[%s1] sm:$0xf]
    %v54 = vld [vmem:[%s1 + $0x4] sm:$0xf]
    %v55 = vld [vmem:[%s2] sm:$0x1]
    %v57 = vlaneseq
    %v58 = vshrl.u32 %v57, 7
    %v59 = vsub.s32 0, %v58
    %v60 = vrot.slane %v55, %v59
    %v64 = vunpack.c.l.b16 %v53
    %v65 = vunpack.c.l.b16 %v54
    %v66 = vpack.c.b16 %v65, %v64
    %vm68 = vcmask 130048
    %v70 = vsel %vm68, %v49, 0
    %v73 = vsel %vm68, %v50, 0
    %v76 = vsel %vm68, %v51, 0
    %v79 = vsel %vm68, %v52, 0
    %81 = vmatprep.subr.bf16.mxu0 0
    %82 = vmatpush1.bf16.msra.mxu0 %v66
    %83 = vmatprep.subr.bf16.mxu0 0
    %84 = vmatpush1.bf16.msra.mxu0 0
    %85 = vmatprep.subr.bf16.mxu0 0
    %86 = vmatpush1.bf16.msra.mxu0 0
    %87 = vmatprep.subr.bf16.mxu0 0
    %88 = vmatpush1.bf16.msra.mxu0 0
    %89 = vmatprep.subr.bf16.mxu0 0
    %90 = vmatpush1.bf16.msra.mxu0 0
    %91 = vmatprep.subr.bf16.mxu0 0
    %92 = vmatpush1.bf16.msra.mxu0 0
    %93 = vmatprep.subr.bf16.mxu0 0
    %94 = vmatpush1.bf16.msra.mxu0 0
    %95 = vmatprep.subr.bf16.mxu0 0
    %96 = vmatpush1.bf16.msra.mxu0 0
    %97 = vmatprep.subr.bf16.mxu0 0
    %98 = vmatpush1.bf16.msra.mxu0 0
    %99 = vmatprep.subr.bf16.mxu0 0
    %100 = vmatpush1.bf16.msra.mxu0 0
    %101 = vmatprep.subr.bf16.mxu0 0
    %102 = vmatpush1.bf16.msra.mxu0 0
    %103 = vmatprep.subr.bf16.mxu0 0
    %104 = vmatpush1.bf16.msra.mxu0 0
    %105 = vmatprep.subr.bf16.mxu0 0
    %106 = vmatpush1.bf16.msra.mxu0 0
    %107 = vmatprep.subr.bf16.mxu0 0
    %108 = vmatpush1.bf16.msra.mxu0 0
    %109 = vmatprep.subr.bf16.mxu0 0
    %110 = vmatpush1.bf16.msra.mxu0 0
    %111 = vmatprep.subr.bf16.mxu0 0
    %112 = vmatpush1.bf16.msra.mxu0 0
    %113 = vmatprep.mubr.bf16.mxu0 0
    %114 = vmatmul.mubr.bf16.gmra.mrb[0].mxu0 %v70
    %v115 = vpop.f32.mrb[0].mxu0
    %v116 = vadd.f32 %v60, %v115
    %v117 = vpop.f32.mrb[0].mxu0
    %v118 = vpop.f32.mrb[0].mxu0
    %v119 = vadd.f32 %v60, %v118
    %v120 = vpop.f32.mrb[0].mxu0
    %121 = vmatprep.mubr.bf16.mxu0 0
    %122 = vmatmul.mubr.bf16.gmra.mrb[0].mxu0 %v73
    %v123 = vpop.f32.mrb[0].mxu0
    %v124 = vadd.f32 %v60, %v123
    %v125 = vpop.f32.mrb[0].mxu0
    %v126 = vpop.f32.mrb[0].mxu0
    %v127 = vadd.f32 %v60, %v126
    %v128 = vpop.f32.mrb[0].mxu0
    %129 = vmatprep.mubr.bf16.mxu0 0
    %130 = vmatmul.mubr.bf16.gmra.mrb[0].mxu0 %v76
    %v131 = vpop.f32.mrb[0].mxu0
    %v132 = vadd.f32 %v60, %v131
    %v133 = vpop.f32.mrb[0].mxu0
    %v134 = vpop.f32.mrb[0].mxu0
    %v135 = vadd.f32 %v60, %v134
    %v136 = vpop.f32.mrb[0].mxu0
    %137 = vmatprep.mubr.bf16.mxu0 0
    %138 = vmatmul.mubr.bf16.gmra.mrb[0].mxu0 %v79
    %v139 = vpop.f32.mrb[0].mxu0
    %v140 = vadd.f32 %v60, %v139
    %v141 = vpop.f32.mrb[0].mxu0
    %v142 = vpop.f32.mrb[0].mxu0
    %v143 = vadd.f32 %v60, %v142
    %v144 = vpop.f32.mrb[0].mxu0
    %145 = vdwg.mxu0
    %v146 = vmax.f32 %v116, 0.0
    %v147 = vmax.f32 %v119, 0.0
    %v148 = vmax.f32 %v124, 0.0
    %v149 = vmax.f32 %v127, 0.0
    %v150 = vmax.f32 %v132, 0.0
    %v151 = vmax.f32 %v135, 0.0
    %v152 = vmax.f32 %v140, 0.0
    %v153 = vmax.f32 %v143, 0.0
    %v154 = vpack.c.bf16 %v147, %v146
    %v155 = vpack.c.bf16 %v149, %v148
    %v156 = vpack.c.bf16 %v151, %v150
    %v157 = vpack.c.bf16 %v153, %v152
    %v158 = vld [vmem:[%s3] sm:$0xf]
    %v159 = vld [vmem:[%s3 + $0x4] sm:$0xf]
    %v160 = vld [vmem:[%s3 + $0x8] sm:$0xf]
    %v161 = vld [vmem:[%s3 + $0xc] sm:$0xf]
    %v162 = vld [vmem:[%s3 + $0x10] sm:$0xf]
    %v163 = vld [vmem:[%s3 + $0x14] sm:$0xf]
    %v164 = vld [vmem:[%s3 + $0x18] sm:$0xf]
    %v165 = vld [vmem:[%s3 + $0x1c] sm:$0xf]
    %v166 = vld [vmem:[%s3 + $0x20] sm:$0xf]
    %v167 = vld [vmem:[%s3 + $0x24] sm:$0xf]
    %v168 = vld [vmem:[%s3 + $0x28] sm:$0xf]
    %v169 = vld [vmem:[%s3 + $0x2c] sm:$0xf]
    %v170 = vld [vmem:[%s3 + $0x30] sm:$0xf]
    %v171 = vld [vmem:[%s3 + $0x34] sm:$0xf]
    %v172 = vld [vmem:[%s3 + $0x38] sm:$0xf]
    %v173 = vld [vmem:[%s3 + $0x3c] sm:$0xf]
    %v174 = vld [vmem:[%s4] sm:$0x1]
    %v176 = vlaneseq
    %v177 = vshrl.u32 %v176, 7
    %v178 = vsub.s32 0, %v177
    %v179 = vrot.slane %v174, %v178
    %v197 = vunpack.c.l.b16 %v158
    %v198 = vunpack.c.l.b16 %v159
    %v199 = vunpack.c.l.b16 %v160
    %v200 = vunpack.c.l.b16 %v161
    %v201 = vunpack.c.l.b16 %v162
    %v202 = vunpack.c.l.b16 %v163
    %v203 = vunpack.c.l.b16 %v164
    %v204 = vunpack.c.l.b16 %v165
    %v205 = vunpack.c.l.b16 %v166
    %v206 = vunpack.c.l.b16 %v167
    %v207 = vunpack.c.l.b16 %v168
    %v208 = vunpack.c.l.b16 %v169
    %v209 = vunpack.c.l.b16 %v170
    %v210 = vunpack.c.l.b16 %v171
    %v211 = vunpack.c.l.b16 %v172
    %v212 = vunpack.c.l.b16 %v173
    %v213 = vpack.c.b16 %v198, %v197
    %v214 = vpack.c.b16 %v200, %v199
    %v215 = vpack.c.b16 %v202, %v201
    %v216 = vpack.c.b16 %v204, %v203
    %v217 = vpack.c.b16 %v206, %v205
    %v218 = vpack.c.b16 %v208, %v207
    %v219 = vpack.c.b16 %v210, %v209
    %v220 = vpack.c.b16 %v212, %v211
    %229 = vmatprep.subr.bf16.mxu0 0
    %230 = vmatpush1.bf16.msra.mxu0 %v213
    %231 = vmatprep.subr.bf16.mxu0 0
    %232 = vmatpush1.bf16.msra.mxu0 %v214
    %233 = vmatprep.subr.bf16.mxu0 0
    %234 = vmatpush1.bf16.msra.mxu0 %v215
    %235 = vmatprep.subr.bf16.mxu0 0
    %236 = vmatpush1.bf16.msra.mxu0 %v216
    %237 = vmatprep.subr.bf16.mxu0 0
    %238 = vmatpush1.bf16.msra.mxu0 %v217
    %239 = vmatprep.subr.bf16.mxu0 0
    %240 = vmatpush1.bf16.msra.mxu0 %v218
    %241 = vmatprep.subr.bf16.mxu0 0
    %242 = vmatpush1.bf16.msra.mxu0 %v219
    %243 = vmatprep.subr.bf16.mxu0 0
    %244 = vmatpush1.bf16.msra.mxu0 %v220
    %245 = vmatprep.subr.bf16.mxu0 0
    %246 = vmatpush1.bf16.msra.mxu0 0
    %247 = vmatprep.subr.bf16.mxu0 0
    %248 = vmatpush1.bf16.msra.mxu0 0
    %249 = vmatprep.subr.bf16.mxu0 0
    %250 = vmatpush1.bf16.msra.mxu0 0
    %251 = vmatprep.subr.bf16.mxu0 0
    %252 = vmatpush1.bf16.msra.mxu0 0
    %253 = vmatprep.subr.bf16.mxu0 0
    %254 = vmatpush1.bf16.msra.mxu0 0
    %255 = vmatprep.subr.bf16.mxu0 0
    %256 = vmatpush1.bf16.msra.mxu0 0
    %257 = vmatprep.subr.bf16.mxu0 0
    %258 = vmatpush1.bf16.msra.mxu0 0
    %259 = vmatprep.subr.bf16.mxu0 0
    %260 = vmatpush1.bf16.msra.mxu0 0
    %261 = vmatprep.mubr.bf16.mxu0 0
    %262 = vmatmul.mubr.bf16.gmra.mrb[0].mxu0 %v154
    %v263 = vpop.f32.mrb[0].mxu0
    %v264 = vadd.f32 %v179, %v263
    %v265 = vpop.f32.mrb[0].mxu0
    %v266 = vpop.f32.mrb[0].mxu0
    %v267 = vadd.f32 %v179, %v266
    %v268 = vpop.f32.mrb[0].mxu0
    %269 = vmatprep.mubr.bf16.mxu0 0
    %270 = vmatmul.mubr.bf16.gmra.mrb[0].mxu0 %v155
    %v271 = vpop.f32.mrb[0].mxu0
    %v272 = vadd.f32 %v179, %v271
    %v273 = vpop.f32.mrb[0].mxu0
    %v274 = vpop.f32.mrb[0].mxu0
    %v275 = vadd.f32 %v179, %v274
    %v276 = vpop.f32.mrb[0].mxu0
    %277 = vmatprep.mubr.bf16.mxu0 0
    %278 = vmatmul.mubr.bf16.gmra.mrb[0].mxu0 %v156
    %v279 = vpop.f32.mrb[0].mxu0
    %v280 = vadd.f32 %v179, %v279
    %v281 = vpop.f32.mrb[0].mxu0
    %v282 = vpop.f32.mrb[0].mxu0
    %v283 = vadd.f32 %v179, %v282
    %v284 = vpop.f32.mrb[0].mxu0
    %285 = vmatprep.mubr.bf16.mxu0 0
    %286 = vmatmul.mubr.bf16.gmra.mrb[0].mxu0 %v157
    %v287 = vpop.f32.mrb[0].mxu0
    %v288 = vadd.f32 %v179, %v287
    %v289 = vpop.f32.mrb[0].mxu0
    %v290 = vpop.f32.mrb[0].mxu0
    %v291 = vadd.f32 %v179, %v290
    %v292 = vpop.f32.mrb[0].mxu0
    %293 = vdwg.mxu0
    %v294 = vmax.f32 %v264, 0.0
    %v295 = vmax.f32 %v267, 0.0
    %v296 = vmax.f32 %v272, 0.0
    %v297 = vmax.f32 %v275, 0.0
    %v298 = vmax.f32 %v280, 0.0
    %v299 = vmax.f32 %v283, 0.0
    %v300 = vmax.f32 %v288, 0.0
    %v301 = vmax.f32 %v291, 0.0
    %v302 = vpack.c.bf16 %v295, %v294
    %v303 = vpack.c.bf16 %v297, %v296
    %v304 = vpack.c.bf16 %v299, %v298
    %v305 = vpack.c.bf16 %v301, %v300
    %v306 = vld [vmem:[#allocation2] sm:$0xf]
    %v307 = vld [vmem:[#allocation2 + $0x4] sm:$0xf]
    %v308 = vld [vmem:[#allocation2 + $0x8] sm:$0xf]
    %v309 = vld [vmem:[#allocation2 + $0xc] sm:$0xf]
    %v310 = vld [vmem:[#allocation2 + $0x10] sm:$0xf]
    %v311 = vld [vmem:[#allocation2 + $0x14] sm:$0xf]
    %v312 = vld [vmem:[#allocation2 + $0x18] sm:$0xf]
    %v313 = vld [vmem:[#allocation2 + $0x1c] sm:$0xf]
    %v314 = vld [vmem:[#allocation2 + $0x20] sm:$0xf]
    %v315 = vld [vmem:[#allocation2 + $0x24] sm:$0xf]
    %v316 = vld [vmem:[#allocation2 + $0x28] sm:$0xf]
    %v317 = vld [vmem:[#allocation2 + $0x2c] sm:$0xf]
    %v318 = vld [vmem:[#allocation2 + $0x30] sm:$0xf]
    %v319 = vld [vmem:[#allocation2 + $0x34] sm:$0xf]
    %v320 = vld [vmem:[#allocation2 + $0x38] sm:$0xf]
    %v321 = vld [vmem:[#allocation2 + $0x3c] sm:$0xf]
    %v322 = vld [vmem:[%s6] sm:$0x1]
    %v324 = vlaneseq
    %v325 = vshrl.u32 %v324, 7
    %v326 = vsub.s32 0, %v325
    %v327 = vrot.slane %v322, %v326
    %v345 = vunpack.c.l.b16 %v306
    %v346 = vunpack.c.l.b16 %v307
    %v347 = vunpack.c.l.b16 %v308
    %v348 = vunpack.c.l.b16 %v309
    %v349 = vunpack.c.l.b16 %v310
    %v350 = vunpack.c.l.b16 %v311
    %v351 = vunpack.c.l.b16 %v312
    %v352 = vunpack.c.l.b16 %v313
    %v353 = vunpack.c.l.b16 %v314
    %v354 = vunpack.c.l.b16 %v315
    %v355 = vunpack.c.l.b16 %v316
    %v356 = vunpack.c.l.b16 %v317
    %v357 = vunpack.c.l.b16 %v318
    %v358 = vunpack.c.l.b16 %v319
    %v359 = vunpack.c.l.b16 %v320
    %v360 = vunpack.c.l.b16 %v321
    %v361 = vpack.c.b16 %v346, %v345
    %v362 = vpack.c.b16 %v348, %v347
    %v363 = vpack.c.b16 %v350, %v349
    %v364 = vpack.c.b16 %v352, %v351
    %v365 = vpack.c.b16 %v354, %v353
    %v366 = vpack.c.b16 %v356, %v355
    %v367 = vpack.c.b16 %v358, %v357
    %v368 = vpack.c.b16 %v360, %v359
    %377 = vmatprep.subr.bf16.mxu0 0
    %378 = vmatpush1.bf16.msra.mxu0 %v361
    %379 = vmatprep.subr.bf16.mxu0 0
    %380 = vmatpush1.bf16.msra.mxu0 %v362
    %381 = vmatprep.subr.bf16.mxu0 0
    %382 = vmatpush1.bf16.msra.mxu0 %v363
    %383 = vmatprep.subr.bf16.mxu0 0
    %384 = vmatpush1.bf16.msra.mxu0 %v364
    %385 = vmatprep.subr.bf16.mxu0 0
    %386 = vmatpush1.bf16.msra.mxu0 %v365
    %387 = vmatprep.subr.bf16.mxu0 0
    %388 = vmatpush1.bf16.msra.mxu0 %v366
    %389 = vmatprep.subr.bf16.mxu0 0
    %390 = vmatpush1.bf16.msra.mxu0 %v367
    %391 = vmatprep.subr.bf16.mxu0 0
    %392 = vmatpush1.bf16.msra.mxu0 %v368
    %393 = vmatprep.subr.bf16.mxu0 0
    %394 = vmatpush1.bf16.msra.mxu0 0
    %395 = vmatprep.subr.bf16.mxu0 0
    %396 = vmatpush1.bf16.msra.mxu0 0
    %397 = vmatprep.subr.bf16.mxu0 0
    %398 = vmatpush1.bf16.msra.mxu0 0
    %399 = vmatprep.subr.bf16.mxu0 0
    %400 = vmatpush1.bf16.msra.mxu0 0
    %401 = vmatprep.subr.bf16.mxu0 0
    %402 = vmatpush1.bf16.msra.mxu0 0
    %403 = vmatprep.subr.bf16.mxu0 0
    %404 = vmatpush1.bf16.msra.mxu0 0
    %405 = vmatprep.subr.bf16.mxu0 0
    %406 = vmatpush1.bf16.msra.mxu0 0
    %407 = vmatprep.subr.bf16.mxu0 0
    %408 = vmatpush1.bf16.msra.mxu0 0
    %409 = vmatprep.mubr.bf16.mxu0 0
    %410 = vmatmul.mubr.bf16.gmra.mrb[0].mxu0 %v302
    %v411 = vpop.f32.mrb[0].mxu0
    %v412 = vadd.f32 %v327, %v411
    %v413 = vpop.f32.mrb[0].mxu0
    %v414 = vpop.f32.mrb[0].mxu0
    %v415 = vadd.f32 %v327, %v414
    %v416 = vpop.f32.mrb[0].mxu0
    %417 = vmatprep.mubr.bf16.mxu0 0
    %418 = vmatmul.mubr.bf16.gmra.mrb[0].mxu0 %v303
    %v419 = vpop.f32.mrb[0].mxu0
    %v420 = vadd.f32 %v327, %v419
    %v421 = vpop.f32.mrb[0].mxu0
    %v422 = vpop.f32.mrb[0].mxu0
    %v423 = vadd.f32 %v327, %v422
    %v424 = vpop.f32.mrb[0].mxu0
    %425 = vmatprep.mubr.bf16.mxu0 0
    %426 = vmatmul.mubr.bf16.gmra.mrb[0].mxu0 %v304
    %v427 = vpop.f32.mrb[0].mxu0
    %v428 = vadd.f32 %v327, %v427
    %v429 = vpop.f32.mrb[0].mxu0
    %v430 = vpop.f32.mrb[0].mxu0
    %v431 = vadd.f32 %v327, %v430
    %v432 = vpop.f32.mrb[0].mxu0
    %433 = vmatprep.mubr.bf16.mxu0 0
    %434 = vmatmul.mubr.bf16.gmra.mrb[0].mxu0 %v305
    %v435 = vpop.f32.mrb[0].mxu0
    %v436 = vadd.f32 %v327, %v435
    %v437 = vpop.f32.mrb[0].mxu0
    %v438 = vpop.f32.mrb[0].mxu0
    %v439 = vadd.f32 %v327, %v438
    %v440 = vpop.f32.mrb[0].mxu0
    %441 = vdwg.mxu0
    %vm442 = vcmask 64512
    %443 = vst.msk [vmem:[%s7] sm:$0xff] %vm442, %v412
    %444 = vst.msk [vmem:[%s7 + $0x8] sm:$0xff] %vm442, %v415
    %445 = vst.msk [vmem:[%s7 + $0x10] sm:$0xff] %vm442, %v420
    %446 = vst.msk [vmem:[%s7 + $0x18] sm:$0xff] %vm442, %v423
    %447 = vst.msk [vmem:[%s7 + $0x20] sm:$0xff] %vm442, %v428
    %448 = vst.msk [vmem:[%s7 + $0x28] sm:$0xff] %vm442, %v431
    %449 = vst.msk [vmem:[%s7 + $0x30] sm:$0xff] %vm442, %v436
    %450 = vst.msk [vmem:[%s7 + $0x38] sm:$0xff] %vm442, %v439
    // Predicated region
    $region34: #{tpu_custom_call.1} parent=1 // pred_check
      _
    $region35: #{tpu_custom_call.1} parent=1 // pred_check_branch
      %452 = sbr.rel (0) target = $region37
    $region36: #{tpu_custom_call.1} parent=1 // pred_region
      _
    $region37: #{tpu_custom_call.1} parent=1 // pred_fallthru
      _
    // Predicated region
    $region38: #{tpu_custom_call.1} parent=1 // pred_check
      _
    $region39: #{tpu_custom_call.1} parent=1 // pred_check_branch
      %454 = sbr.rel (0) target = $region41
    $region40: #{tpu_custom_call.1} parent=1 // pred_region
      _
    $region41: #{tpu_custom_call.1} parent=1 // pred_fallthru
      _
    %455 = vsyncpa [#allocation3], 1

</llo_original>
